<compile_context>
chip_gen: v5e
topology: v5e:2x2
jax: 0.10.0
libtpu: 0.0.40
codegen_flags: <defaults>
</compile_context>

<pallas_src>
import functools

import jax
import jax.numpy as jnp
from jax.experimental import pallas as pl
from jax.experimental.pallas import tpu as pltpu

HIDDEN = 64       # logical hidden width (matches nn.Linear(..., 64))
HIDDEN_PAD = 128  # padded to full lane width (zero columns/rows -> exact)


def critic_kernel(state_ref, w1_ref, b1_ref, w2_ref, b2_ref, w3_ref, b3_ref,
                  out_ref):
    # Layer 1: Linear(state_dim, 64->128) + Tanh.  bf16 MXU operands, f32 acc;
    # bias-add / tanh kept in f32 (v5e has no bf16 VPU/EUP).
    x = state_ref[...].astype(jnp.bfloat16)
    h = jnp.tanh(
        jnp.dot(x, w1_ref[...], preferred_element_type=jnp.float32)
        + b1_ref[...]
    )
    # Layer 2: Linear(128, 128) + Tanh (padded rows/cols are zero -> exact).
    h = jnp.tanh(
        jnp.dot(h.astype(jnp.bfloat16), w2_ref[...],
                preferred_element_type=jnp.float32)
        + b2_ref[...]
    )
    # Value head Linear(64->128, 1): VPU multiply with the [1, 128] weight row,
    # XLU cross-lane reduce, scalar bias.  No MXU pass, no padded output cols.
    v = jnp.sum(h * w3_ref[...], axis=-1, keepdims=True) + b3_ref[...]
    out_ref[...] = v.astype(out_ref.dtype)


def init_critic_params(key, state_dim, hidden=HIDDEN):
    """Deterministic init mimicking nn.Linear's uniform(-1/sqrt(fan_in), ...)."""
    ks = jax.random.split(key, 6)

    def linear(kw, kb, fan_in, fan_out):
        bound = fan_in ** -0.5
        w = jax.random.uniform(kw, (fan_in, fan_out), jnp.float32, -bound, bound)
        b = jax.random.uniform(kb, (1, fan_out), jnp.float32, -bound, bound)
        return w, b

    w1, b1 = linear(ks[0], ks[1], state_dim, hidden)
    w2, b2 = linear(ks[2], ks[3], hidden, hidden)
    w3, b3 = linear(ks[4], ks[5], hidden, 1)
    return (w1, b1, w2, b2, w3, b3)


def pad_critic_params(params):
    """Zero-pad hidden 64->128, cast matmul weights to bf16, lay the value-head
    weight out as a [1, HIDDEN_PAD] row.  Do this ONCE per parameter update."""
    w1, b1, w2, b2, w3, b3 = params
    h = w1.shape[1]
    dh = HIDDEN_PAD - h
    w1p = jnp.pad(w1, ((0, 0), (0, dh))).astype(jnp.bfloat16)
    b1p = jnp.pad(b1, ((0, 0), (0, dh)))                       # f32 [1, 128]
    w2p = jnp.pad(w2, ((0, dh), (0, dh))).astype(jnp.bfloat16)
    b2p = jnp.pad(b2, ((0, 0), (0, dh)))                       # f32 [1, 128]
    w3p = jnp.pad(w3, ((0, dh), (0, 0))).T                     # f32 [1, 128] row
    b3p = b3.reshape(1, 1)                                     # f32 [1, 1]
    return (w1p, b1p, w2p, b2p, w3p, b3p)


@functools.partial(jax.jit, static_argnames=("tile_b",))
def critic_forward(state, padded_params, tile_b=2048):
    """state: [B, state_dim] f32. Returns value estimates [B, 1] f32."""
    w1, b1, w2, b2, w3, b3 = padded_params
    B, S = state.shape

    # Round batch to a sublane multiple and choose the row tile.
    b_pad = -(-B // 8) * 8
    tb = min(tile_b, b_pad)
    # v7x has 2 TensorCores: keep >= 2 grid steps when the batch allows it
    # (without introducing extra padding).
    if b_pad // tb < 2 and b_pad % 16 == 0:
        tb = b_pad // 2
    b_pad = -(-b_pad // tb) * tb
    if b_pad != B:
        # Fallback for ragged batches only; power-of-two PPO batches skip this.
        state = jnp.pad(state, ((0, b_pad - B), (0, 0)))

    vmem = pltpu.MemorySpace.VMEM
    # Weights/biases: replicated full-extent blocks, resident in VMEM.
    rep = lambda arr: pl.BlockSpec(arr.shape, lambda i: (0, 0), memory_space=vmem)

    out = pl.pallas_call(
        critic_kernel,
        out_shape=jax.ShapeDtypeStruct((b_pad, 1), jnp.float32),
        grid=(b_pad // tb,),
        in_specs=[
            # NOTE: if DMA latency shows up at small tiles, deepen this spec
            # with pipeline_mode=pl.Buffered(3).
            pl.BlockSpec((tb, S), lambda i: (i, 0), memory_space=vmem),
            rep(w1), rep(b1), rep(w2), rep(b2), rep(w3), rep(b3),
        ],
        out_specs=pl.BlockSpec((tb, 1), lambda i: (i, 0), memory_space=vmem),
        compiler_params=pltpu.CompilerParams(
            # Batch tiles are independent -> megacore sharding on v7x.
            dimension_semantics=("parallel",),
        ),
    )(state, w1, b1, w2, b2, w3, b3)

    # Keep only the real rows (output is already 1 column wide).
    return out[:B]


def critic_ref(state, params, mxu_dtype=jnp.float32):
    """Pure-JAX reference (logical, unpadded parameters)."""
    w1, b1, w2, b2, w3, b3 = params
    cast = lambda a: a.astype(mxu_dtype)
    x = jnp.tanh(jnp.dot(cast(state), cast(w1),
                         preferred_element_type=jnp.float32) + b1)
    x = jnp.tanh(jnp.dot(cast(x), cast(w2),
                         preferred_element_type=jnp.float32) + b2)
    return x @ w3 + b3


if __name__ == "__main__":
    key = jax.random.PRNGKey(0)
    k_params, k_state = jax.random.split(key)

    batch = 8
    state_dim = 8

    params = init_critic_params(k_params, state_dim)
    padded = pad_critic_params(params)
    state = jax.random.normal(k_state, (batch, state_dim), jnp.float32)

    value = critic_forward(state, padded)
    jax.block_until_ready(value)
    assert value.shape == (batch, 1)

    # bf16-matched reference: should agree very closely (f32 accumulation).
    value_ref_bf16 = critic_ref(state, params, mxu_dtype=jnp.bfloat16)
    assert jnp.allclose(value, value_ref_bf16, atol=1e-3, rtol=1e-3)

    # f32 reference (exact module semantics): loose tolerance for bf16 MXU ops.
    value_ref_f32 = critic_ref(state, params, mxu_dtype=jnp.float32)
    assert jnp.allclose(value, value_ref_f32, atol=1e-1, rtol=1e-1)

    print("KERNEL_OK")
</pallas_src>

<mosaic_0001>
module attributes {stable_mosaic.version = 11 : i64} {
  func.func @critic_kernel(%arg0: i32, %arg1: memref<8x8xf32, #tpu.memory_space<vmem>>, %arg2: memref<8x128xbf16, #tpu.memory_space<vmem>>, %arg3: memref<1x128xf32, #tpu.memory_space<vmem>>, %arg4: memref<128x128xbf16, #tpu.memory_space<vmem>>, %arg5: memref<1x128xf32, #tpu.memory_space<vmem>>, %arg6: memref<1x128xf32, #tpu.memory_space<vmem>>, %arg7: memref<1x1xf32, #tpu.memory_space<vmem>>, %arg8: memref<8x1xf32, #tpu.memory_space<vmem>>) attributes {dimension_semantics = [#tpu.dimension_semantics<parallel>], iteration_bounds = array<i64: 1>, scalar_prefetch = 0 : i64, scratch_operands = 0 : i64, tpu.core_type = #tpu.core_type<tc>, window_params = [{transform_indices = @transform_0, window_bounds = array<i64: 8, 8>}, {pipeline_mode = #tpu.pipeline_mode<synchronous>, transform_indices = @transform_1, window_bounds = array<i64: 8, 128>}, {pipeline_mode = #tpu.pipeline_mode<synchronous>, transform_indices = @transform_2, window_bounds = array<i64: 1, 128>}, {pipeline_mode = #tpu.pipeline_mode<synchronous>, transform_indices = @transform_3, window_bounds = array<i64: 128, 128>}, {pipeline_mode = #tpu.pipeline_mode<synchronous>, transform_indices = @transform_4, window_bounds = array<i64: 1, 128>}, {pipeline_mode = #tpu.pipeline_mode<synchronous>, transform_indices = @transform_5, window_bounds = array<i64: 1, 128>}, {pipeline_mode = #tpu.pipeline_mode<synchronous>, transform_indices = @transform_6, window_bounds = array<i64: 1, 1>}, {transform_indices = @transform_7, window_bounds = array<i64: 8, 1>}]} {
    %c0 = arith.constant 0 : index
    %c0_0 = arith.constant 0 : index
    %0 = vector.load %arg1[%c0, %c0_0] : memref<8x8xf32, #tpu.memory_space<vmem>>, vector<8x8xf32>
    %1 = arith.truncf %0 : vector<8x8xf32> to vector<8x8xbf16>
    %c0_1 = arith.constant 0 : index
    %c0_2 = arith.constant 0 : index
    %2 = vector.load %arg2[%c0_1, %c0_2] : memref<8x128xbf16, #tpu.memory_space<vmem>>, vector<8x128xbf16>
    %cst = arith.constant dense<0.000000e+00> : vector<8x128xf32>
    %3 = tpu.matmul %1, %2, %cst {dimension_numbers = #tpu.dot_dimension_numbers<[1], [0], [0], [1], [0, 0, 1, 1], [], []>} : vector<8x8xbf16>, vector<8x128xbf16>, vector<8x128xf32> -> vector<8x128xf32>
    %c0_3 = arith.constant 0 : index
    %c0_4 = arith.constant 0 : index
    %4 = vector.load %arg3[%c0_3, %c0_4] : memref<1x128xf32, #tpu.memory_space<vmem>>, vector<1x128xf32>
    %5 = vector.broadcast %4 : vector<1x128xf32> to vector<8x128xf32>
    %6 = arith.addf %3, %5 : vector<8x128xf32>
    %7 = math.tanh %6 : vector<8x128xf32>
    %8 = arith.truncf %7 : vector<8x128xf32> to vector<8x128xbf16>
    %c0_5 = arith.constant 0 : index
    %c0_6 = arith.constant 0 : index
    %9 = vector.load %arg4[%c0_5, %c0_6] : memref<128x128xbf16, #tpu.memory_space<vmem>>, vector<128x128xbf16>
    %cst_7 = arith.constant dense<0.000000e+00> : vector<8x128xf32>
    %10 = tpu.matmul %8, %9, %cst_7 {dimension_numbers = #tpu.dot_dimension_numbers<[1], [0], [0], [1], [0, 0, 1, 1], [], []>} : vector<8x128xbf16>, vector<128x128xbf16>, vector<8x128xf32> -> vector<8x128xf32>
    %c0_8 = arith.constant 0 : index
    %c0_9 = arith.constant 0 : index
    %11 = vector.load %arg5[%c0_8, %c0_9] : memref<1x128xf32, #tpu.memory_space<vmem>>, vector<1x128xf32>
    %12 = vector.broadcast %11 : vector<1x128xf32> to vector<8x128xf32>
    %13 = arith.addf %10, %12 : vector<8x128xf32>
    %14 = math.tanh %13 : vector<8x128xf32>
    %c0_10 = arith.constant 0 : index
    %c0_11 = arith.constant 0 : index
    %15 = vector.load %arg6[%c0_10, %c0_11] : memref<1x128xf32, #tpu.memory_space<vmem>>, vector<1x128xf32>
    %16 = vector.broadcast %15 : vector<1x128xf32> to vector<8x128xf32>
    %17 = arith.mulf %14, %16 : vector<8x128xf32>
    %cst_12 = arith.constant dense<0.000000e+00> : vector<8xf32>
    %18 = vector.multi_reduction <add>, %17, %cst_12 [1] : vector<8x128xf32> to vector<8xf32>
    %19 = vector.shape_cast %18 : vector<8xf32> to vector<8x1xf32>
    %c0_13 = arith.constant 0 : index
    %c0_14 = arith.constant 0 : index
    %20 = vector.load %arg7[%c0_13, %c0_14] : memref<1x1xf32, #tpu.memory_space<vmem>>, vector<1x1xf32>
    %21 = vector.broadcast %20 : vector<1x1xf32> to vector<8x1xf32>
    %22 = arith.addf %19, %21 : vector<8x1xf32>
    %c0_15 = arith.constant 0 : index
    %c0_16 = arith.constant 0 : index
    %23 = vector.load %arg8[%c0_15, %c0_16] : memref<8x1xf32, #tpu.memory_space<vmem>>, vector<8x1xf32>
    tpu.vector_store %arg8[%c0_15, %c0_16], %22 {strides = array<i32>} : memref<8x1xf32, #tpu.memory_space<vmem>>, vector<8x1xf32>,
    return
  }
  func.func @transform_0(%arg0: i32) -> (i32, i32) {
    %c0_i32 = arith.constant 0 : i32
    %c0_i32_0 = arith.constant 0 : i32
    return %arg0, %c0_i32 : i32, i32
  }
  func.func @transform_1(%arg0: i32) -> (i32, i32) {
    %c0_i32 = arith.constant 0 : i32
    %c0_i32_0 = arith.constant 0 : i32
    %c0_i32_1 = arith.constant 0 : i32
    return %c0_i32, %c0_i32_0 : i32, i32
  }
  func.func @transform_2(%arg0: i32) -> (i32, i32) {
    %c0_i32 = arith.constant 0 : i32
    %c0_i32_0 = arith.constant 0 : i32
    %c0_i32_1 = arith.constant 0 : i32
    return %c0_i32, %c0_i32_0 : i32, i32
  }
  func.func @transform_3(%arg0: i32) -> (i32, i32) {
    %c0_i32 = arith.constant 0 : i32
    %c0_i32_0 = arith.constant 0 : i32
    %c0_i32_1 = arith.constant 0 : i32
    return %c0_i32, %c0_i32_0 : i32, i32
  }
  func.func @transform_4(%arg0: i32) -> (i32, i32) {
    %c0_i32 = arith.constant 0 : i32
    %c0_i32_0 = arith.constant 0 : i32
    %c0_i32_1 = arith.constant 0 : i32
    return %c0_i32, %c0_i32_0 : i32, i32
  }
  func.func @transform_5(%arg0: i32) -> (i32, i32) {
    %c0_i32 = arith.constant 0 : i32
    %c0_i32_0 = arith.constant 0 : i32
    %c0_i32_1 = arith.constant 0 : i32
    return %c0_i32, %c0_i32_0 : i32, i32
  }
  func.func @transform_6(%arg0: i32) -> (i32, i32) {
    %c0_i32 = arith.constant 0 : i32
    %c0_i32_0 = arith.constant 0 : i32
    %c0_i32_1 = arith.constant 0 : i32
    return %c0_i32, %c0_i32_0 : i32, i32
  }
  func.func @transform_7(%arg0: i32) -> (i32, i32) {
    %c0_i32 = arith.constant 0 : i32
    %c0_i32_0 = arith.constant 0 : i32
    return %arg0, %c0_i32 : i32, i32
  }
}

</mosaic_0001>

<llo_original>
// kernel: critic_forward.1
$region0: #{critic_forward.1}
  #allocation0 [shape = 'u32[]', space=smem, size = 0x4, offset = 0x4, fixed_abs, tag = 'smem constant byte address 0x4 - core index']
  #allocation1 [shape = 'u32[72,128]{1,0:T(1,128)}', space=vmem, size = 0x9000, scoped, tag = 'internal scratch']
  #allocation2 [shape = 'f32[1,1]{1,0:T(1,128)S(1)}', space=vmem, size = 0x200, scoped, tag = 'scoped memory for critic_forward.1']
  %s0 = inlined_call_operand.hbm [shape: f32[8,8], index: 0, kind: input, shape index: {}]
  %s1 = inlined_call_operand.hbm [shape: bf16[8,128], index: 1, kind: input, shape index: {}]
  %s2 = inlined_call_operand.vmem [shape: f32[1,128], index: 2, kind: input, shape index: {}]
  %s3 = inlined_call_operand.hbm [shape: bf16[128,128], index: 3, kind: input, shape index: {}]
  %s4 = inlined_call_operand.vmem [shape: f32[1,128], index: 4, kind: input, shape index: {}]
  %s5 = inlined_call_operand.vmem [shape: f32[1,128], index: 5, kind: input, shape index: {}]
  %s6 = inlined_call_operand.<no memory space> [shape: f32[1,1], index: 6, kind: input, shape index: {}]
  %s7 = inlined_call_operand.vmem [shape: f32[8,1], index: 7, kind: output, shape index: {}]
  %s8 = sld [smem:[#allocation0]]
  $region50: #{critic_forward.1} parent=0
    _
  %s10 = ssub.s32 1, %s8
  %s11 = scalar_select 0, %s10, %s8
  %v12 = vstv %s6
  %13 = vst [vmem:[#allocation2] sm:$0x1] %v12
  $region1: #{critic_forward.1} parent=0
    #allocation3 [shape = 'u8[4096]{0}', space=vmem, size = 0x1000, scoped, tag = 'input window, operand 0, single buffered']
    #allocation4 [shape = 's32[1]{0}', space=sflag, size = 0x4, scoped, tag = 'scoped memory for critic_forward.1']
    #allocation5 [shape = 'u8[2048]{0}', space=vmem, size = 0x800, scoped, tag = 'input window, operand 1, single buffered']
    #allocation6 [shape = 's32[1]{0}', space=sflag, size = 0x4, scoped, tag = 'scoped memory for critic_forward.1']
    #allocation7 [shape = 'u8[32768]{0}', space=vmem, size = 0x8000, scoped, tag = 'input window, operand 3, single buffered']
    %14 = vsyncpa [#allocation4], 0
    %15 = vsyncpa [#allocation6], 0
    // Predicated region
    $region2: #{critic_forward.1} parent=1 // pred_check
      _
    $region3: #{critic_forward.1} parent=1 // pred_check_branch
      %17 = sbr.rel (0) target = $region5
    $region4: #{critic_forward.1} parent=1 // pred_region
      %19 = vsyncadd [#allocation4], 0
      %s21 = sshll.u32 %s0, 4
      %s22 = int_to_ptr.hbm [resolvable:$true] %s21
      %s23 = sshll.u32 [#allocation3], 4
      %s24 = int_to_ptr.vmem [resolvable:$true] %s23
      %26 = dma.hbm_to_vmem [thread:$0]  %s22, 128, %s24, [#allocation4]
    $region5: #{critic_forward.1} parent=1 // pred_fallthru
      _
    // Predicated region
    $region6: #{critic_forward.1} parent=1 // pred_check
      _
    $region7: #{critic_forward.1} parent=1 // pred_check_branch
      %28 = sbr.rel (0) target = $region9
    $region8: #{critic_forward.1} parent=1 // pred_region
      %30 = vsyncadd [#allocation6], 0
      %s32 = sshll.u32 %s1, 4
      %s33 = int_to_ptr.hbm [resolvable:$true] %s32
      %s34 = sshll.u32 [#allocation5], 4
      %s35 = int_to_ptr.vmem [resolvable:$true] %s34
      %37 = dma.hbm_to_vmem [thread:$0]  %s33, 64, %s35, [#allocation6]
    $region9: #{critic_forward.1} parent=1 // pred_fallthru
      _
    // Predicated region
    $region10: #{critic_forward.1} parent=1 // pred_check
      _
    $region11: #{critic_forward.1} parent=1 // pred_check_branch
      %39 = sbr.rel (0) target = $region13
    $region12: #{critic_forward.1} parent=1 // pred_region
      _
    $region13: #{critic_forward.1} parent=1 // pred_fallthru
      _
    // Predicated region
    $region14: #{critic_forward.1} parent=1 // pred_check
      _
    $region15: #{critic_forward.1} parent=1 // pred_check_branch
      %41 = sbr.rel (0) target = $region17
    $region16: #{critic_forward.1} parent=1 // pred_region
      %43 = vsyncadd [#allocation6], 0
      %s44 = sshll.u32 %s3, 4
      %s45 = int_to_ptr.hbm [resolvable:$true] %s44
      %s46 = sshll.u32 [#allocation7], 4
      %s47 = int_to_ptr.vmem [resolvable:$true] %s46
      %52 = dma.hbm_to_vmem [thread:$0]  %s45, 1024, %s47, [#allocation6], 64, 64, 4
    $region17: #{critic_forward.1} parent=1 // pred_fallthru
      _
    // Predicated region
    $region18: #{critic_forward.1} parent=1 // pred_check
      _
    $region19: #{critic_forward.1} parent=1 // pred_check_branch
      %54 = sbr.rel (0) target = $region21
    $region20: #{critic_forward.1} parent=1 // pred_region
      _
    $region21: #{critic_forward.1} parent=1 // pred_fallthru
      _
    // Predicated region
    $region22: #{critic_forward.1} parent=1 // pred_check
      _
    $region23: #{critic_forward.1} parent=1 // pred_check_branch
      %56 = sbr.rel (0) target = $region25
    $region24: #{critic_forward.1} parent=1 // pred_region
      _
    $region25: #{critic_forward.1} parent=1 // pred_fallthru
      _
    // Predicated region
    $region26: #{critic_forward.1} parent=1 // pred_check
      _
    $region27: #{critic_forward.1} parent=1 // pred_check_branch
      %58 = sbr.rel (0) target = $region29
    $region28: #{critic_forward.1} parent=1 // pred_region
      _
    $region29: #{critic_forward.1} parent=1 // pred_fallthru
      _
    // Predicated region
    $region30: #{critic_forward.1} parent=1 // pred_check
      _
    $region31: #{critic_forward.1} parent=1 // pred_check_branch
      %60 = sbr.rel (0) target = $region33
    $region32: #{critic_forward.1} parent=1 // pred_region
      %62 = dma.done [#allocation4], 128
    $region33: #{critic_forward.1} parent=1 // pred_fallthru
      _
    // Predicated region
    $region34: #{critic_forward.1} parent=1 // pred_check
      _
    $region35: #{critic_forward.1} parent=1 // pred_check_branch
      %64 = sbr.rel (0) target = $region37
    $region36: #{critic_forward.1} parent=1 // pred_region
      %66 = dma.done [#allocation6], 64
    $region37: #{critic_forward.1} parent=1 // pred_fallthru
      _
    // Predicated region
    $region38: #{critic_forward.1} parent=1 // pred_check
      _
    $region39: #{critic_forward.1} parent=1 // pred_check_branch
      %68 = sbr.rel (0) target = $region41
    $region40: #{critic_forward.1} parent=1 // pred_region
      %70 = dma.done [#allocation6], 1024
    $region41: #{critic_forward.1} parent=1 // pred_fallthru
      _
    %v72 = vld [vmem:[#allocation3] sm:$0xff]
    %v73 = vpack.c.bf16 %v72, %v72
    %v74 = vld [vmem:[#allocation5] sm:$0xf]
    %v75 = vld [vmem:[%s2] sm:$0x1]
    %v77 = vperm.slane %v75, 0
    %vm79 = vcmask 64512
    %v81 = vsel %vm79, %v73, 0
    %vm83 = vcmask 1043456
    %v85 = vsel %vm83, %v74, 0
    %87 = vmatpush.bf16.msra.mxu0 0
    %88 = vmatpush.bf16.msra.mxu0 0
    %89 = vmatpush.bf16.msra.mxu0 0
    %90 = vmatpush.bf16.msra.mxu0 0
    %91 = vmatpush.bf16.msra.mxu0 0
    %92 = vmatpush.bf16.msra.mxu0 0
    %93 = vmatpush.bf16.msra.mxu0 0
    %94 = vmatpush.bf16.msra.mxu0 %v85
    %95 = vmatmul.bf16.gmra.mxu0 %v81
    %v96 = vpop.f32.mrf.mxu0
    %v97 = vadd.f32 %v77, %v96
    %v98 = vpop.f32.mrf.mxu0
    %99 = vdwg.mxu0
    %v100 = vtanh.pop %v97
    %v101 = vpack.c.bf16 %v100, %v100
    %v102 = vld [vmem:[#allocation7] sm:$0xf]
    %v103 = vld [vmem:[#allocation7 + $0x4] sm:$0xf]
    %v104 = vld [vmem:[#allocation7 + $0x8] sm:$0xf]
    %v105 = vld [vmem:[#allocation7 + $0xc] sm:$0xf]
    %v106 = vld [vmem:[#allocation7 + $0x10] sm:$0xf]
    %v107 = vld [vmem:[#allocation7 + $0x14] sm:$0xf]
    %v108 = vld [vmem:[#allocation7 + $0x18] sm:$0xf]
    %v109 = vld [vmem:[#allocation7 + $0x1c] sm:$0xf]
    %v110 = vld [vmem:[#allocation7 + $0x20] sm:$0xf]
    %v111 = vld [vmem:[#allocation7 + $0x24] sm:$0xf]
    %v112 = vld [vmem:[#allocation7 + $0x28] sm:$0xf]
    %v113 = vld [vmem:[#allocation7 + $0x2c] sm:$0xf]
    %v114 = vld [vmem:[#allocation7 + $0x30] sm:$0xf]
    %v115 = vld [vmem:[#allocation7 + $0x34] sm:$0xf]
    %v116 = vld [vmem:[#allocation7 + $0x38] sm:$0xf]
    %v117 = vld [vmem:[#allocation7 + $0x3c] sm:$0xf]
    %v118 = vld [vmem:[%s4] sm:$0x1]
    %v120 = vperm.slane %v118, 0
    %v138 = vunpack.c.l.b16 %v102
    %v139 = vunpack.c.l.b16 %v103
    %v140 = vunpack.c.l.b16 %v104
    %v141 = vunpack.c.l.b16 %v105
    %v142 = vunpack.c.l.b16 %v106
    %v143 = vunpack.c.l.b16 %v107
    %v144 = vunpack.c.l.b16 %v108
    %v145 = vunpack.c.l.b16 %v109
    %v146 = vunpack.c.l.b16 %v110
    %v147 = vunpack.c.l.b16 %v111
    %v148 = vunpack.c.l.b16 %v112
    %v149 = vunpack.c.l.b16 %v113
    %v150 = vunpack.c.l.b16 %v114
    %v151 = vunpack.c.l.b16 %v115
    %v152 = vunpack.c.l.b16 %v116
    %v153 = vunpack.c.l.b16 %v117
    %v154 = vpack.c.b16 %v139, %v138
    %v155 = vpack.c.b16 %v141, %v140
    %v156 = vpack.c.b16 %v143, %v142
    %v157 = vpack.c.b16 %v145, %v144
    %v158 = vpack.c.b16 %v147, %v146
    %v159 = vpack.c.b16 %v149, %v148
    %v160 = vpack.c.b16 %v151, %v150
    %v161 = vpack.c.b16 %v153, %v152
    %170 = vmatpush.bf16.msra.mxu0 %v161
    %171 = vmatpush.bf16.msra.mxu0 %v160
    %172 = vmatpush.bf16.msra.mxu0 %v159
    %173 = vmatpush.bf16.msra.mxu0 %v158
    %174 = vmatpush.bf16.msra.mxu0 %v157
    %175 = vmatpush.bf16.msra.mxu0 %v156
    %176 = vmatpush.bf16.msra.mxu0 %v155
    %177 = vmatpush.bf16.msra.mxu0 %v154
    %178 = vmatmul.bf16.gmra.mxu0 %v101
    %v179 = vpop.f32.mrf.mxu0
    %v180 = vadd.f32 %v120, %v179
    %v181 = vpop.f32.mrf.mxu0
    %182 = vdwg.mxu0
    %v183 = vtanh.pop %v180
    %v184 = vld [vmem:[%s5] sm:$0x1]
    %v186 = vperm.slane %v184, 0
    %v188 = vmul.f32 %v183, %v186
    %189 = vadd.xlane.f32.xlu0 %v188
    %v190 = vpop.xlane.xlu0 %189
    %v191 = vld [vmem:[#allocation2] sm:$0x1]
    %v193 = vperm.slane %v191, 0
    %v195 = vadd.f32 %v190, %v193
    %vm196 = vcmask 7168
    %197 = vst.msk [vmem:[%s7] sm:$0xff] %vm196, %v195
    // Predicated region
    $region42: #{critic_forward.1} parent=1 // pred_check
      _
    $region43: #{critic_forward.1} parent=1 // pred_check_branch
      %199 = sbr.rel (0) target = $region45
    $region44: #{critic_forward.1} parent=1 // pred_region
      _
    $region45: #{critic_forward.1} parent=1 // pred_fallthru
      _
    // Predicated region
    $region46: #{critic_forward.1} parent=1 // pred_check
      _
    $region47: #{critic_forward.1} parent=1 // pred_check_branch
      %201 = sbr.rel (0) target = $region49
    $region48: #{critic_forward.1} parent=1 // pred_region
      _
    $region49: #{critic_forward.1} parent=1 // pred_fallthru
      _
    %202 = vsyncpa [#allocation4], 1
    %203 = vsyncpa [#allocation6], 1

</llo_original>
